<compile_context>
chip_gen: v7x
topology: tpu7x:2x2x1
jax: 0.10.0
libtpu: 0.0.40
codegen_flags: <defaults>
</compile_context>

<pallas_src>
import functools

import jax
import jax.numpy as jnp
from jax.experimental import pallas as pl
from jax.experimental.pallas import tpu as pltpu

LANE = 128


def attention_kernel(x_ref, q_ref, wp_ref, bp_ref, o_ref, *, scale, n_true, batch):
    x = x_ref[...]                         # (B, Npad)   k == v == x
    q = q_ref[...]                         # (B, Npad)
    npad = x.shape[-1]

    # ---- scores + softmax, shape (B, B) ----
    s = jax.lax.dot_general(q, x, (((1,), (1,)), ((), ())),
                            preferred_element_type=jnp.float32) * scale
    m = jnp.max(s, axis=-1, keepdims=True)
    e = jnp.exp(s - m)
    p = e * pl.reciprocal(jnp.sum(e, axis=-1, keepdims=True), approx=True)

    # ---- z = attn @ v, shape (B, Npad) ----
    z = jnp.dot(p, x, preferred_element_type=jnp.float32)

    # ---- fused permutation + projection:  out = reshape(z^T, (B, N)) @ Wp + bp ----
    # y[i, c*B + r] = z[r, i*C + c]  (valid because N % B == 0, checked in wrapper)
    C = n_true // batch
    i_idx = jax.lax.broadcasted_iota(jnp.int32, (batch, npad), 0)
    n_idx = jax.lax.broadcasted_iota(jnp.int32, (batch, npad), 1)
    d = n_idx - i_idx * C                  # hoisted out of the c-loop
    acc = jnp.zeros((batch, npad), jnp.float32)
    for c in range(C):                     # C is small & static -> unrolled
        sel = (d == c).astype(jnp.float32)                          # (B, Npad) one-hot
        a_c = jax.lax.dot_general(sel, z, (((1,), (1,)), ((), ())),
                                  preferred_element_type=jnp.float32)  # (B, B): a_c[i,r]=z[r,iC+c]
        w_c = wp_ref[c * batch:(c + 1) * batch, :]                   # (B, Npad)
        acc = acc + jnp.dot(a_c, w_c, preferred_element_type=jnp.float32)
    o_ref[...] = acc + bp_ref[...]         # bias broadcast once, after the loop


def _full_spec(shape):
    return pl.BlockSpec(shape, lambda i: (0,) * len(shape))


def attention_forward(x, q, w_proj, b_proj, *, num_heads=2):
    """x, q: (B, N) with N == dim.  w_proj: (dim, dim) stored as (in, out)
    (i.e. torch proj.weight.T), b_proj: (dim,)."""
    B, N = x.shape
    assert q.shape == (B, N)
    # TODO(synk): fused in-kernel permutation assumes N % B == 0 (holds for this
    # model); for other shapes fall back to a wrapper-side transpose/reshape.
    assert N % B == 0, "fused permutation requires N % B == 0"
    head_dim = N // num_heads
    scale = head_dim ** (-0.5)

    n_pad = ((N + LANE - 1) // LANE) * LANE
    pad = n_pad - N
    x_p = jnp.pad(x.astype(jnp.float32), ((0, 0), (0, pad)))
    q_p = jnp.pad(q.astype(jnp.float32), ((0, 0), (0, pad)))
    wp_p = jnp.pad(w_proj.astype(jnp.float32), ((0, pad), (0, pad)))
    bp_p = jnp.pad(b_proj.astype(jnp.float32).reshape(1, N), ((0, 0), (0, pad)))

    out_p = pl.pallas_call(
        functools.partial(attention_kernel, scale=scale, n_true=N, batch=B),
        out_shape=jax.ShapeDtypeStruct((B, n_pad), jnp.float32),
        grid=(1,),
        in_specs=[
            _full_spec((B, n_pad)),        # x (= k = v)
            _full_spec((B, n_pad)),        # q
            _full_spec((n_pad, n_pad)),    # proj weight (in, out), zero-padded
            _full_spec((1, n_pad)),        # proj bias, zero-padded
        ],
        out_specs=_full_spec((B, n_pad)),  # lane-dense output slab
        compiler_params=pltpu.CompilerParams(
            dimension_semantics=("arbitrary",)),
    )(x_p, q_p, wp_p, bp_p)
    return out_p[:, :N]


def attention_ref(x, q, w_proj, b_proj, *, num_heads=2):
    """Pure-JAX reference mirroring the PyTorch forward exactly."""
    B, N = x.shape
    scale = (N // num_heads) ** (-0.5)
    s = (q @ x.T) * scale
    p = jax.nn.softmax(s, axis=-1)
    z = p @ x
    y = jnp.reshape(jnp.transpose(z), (B, N))
    return y @ w_proj + b_proj


if __name__ == "__main__":
    B, dim, num_heads = 8, 32, 2
    key = jax.random.PRNGKey(0)
    kx, kq, kw, kb = jax.random.split(key, 4)
    x = jax.random.normal(kx, (B, dim), dtype=jnp.float32)
    q = jax.random.normal(kq, (B, dim), dtype=jnp.float32)
    w_proj = (0.02 * jax.random.normal(kw, (dim, dim))).astype(jnp.float32)  # (in, out)
    b_proj = (0.02 * jax.random.normal(kb, (dim,))).astype(jnp.float32)

    fwd = jax.jit(functools.partial(attention_forward, num_heads=num_heads))
    out = fwd(x, q, w_proj, b_proj)
    jax.block_until_ready(out)
    assert out.shape == (B, dim) and out.dtype == jnp.float32

    ref = attention_ref(x, q, w_proj, b_proj, num_heads=num_heads)
    err = float(jnp.max(jnp.abs(out - ref)))
    assert err < 2e-2, f"max abs error vs reference: {err}"
    print("KERNEL_OK")
</pallas_src>

<mosaic_0001>
module attributes {stable_mosaic.version = 11 : i64} {
  func.func @attention_kernel(%arg0: i32, %arg1: memref<8x128xf32, #tpu.memory_space<vmem>>, %arg2: memref<8x128xf32, #tpu.memory_space<vmem>>, %arg3: memref<128x128xf32, #tpu.memory_space<vmem>>, %arg4: memref<1x128xf32, #tpu.memory_space<vmem>>, %arg5: memref<8x128xf32, #tpu.memory_space<vmem>>) attributes {dimension_semantics = [#tpu.dimension_semantics<arbitrary>], iteration_bounds = array<i64: 1>, scalar_prefetch = 0 : i64, scratch_operands = 0 : i64, tpu.core_type = #tpu.core_type<tc>, window_params = [{pipeline_mode = #tpu.pipeline_mode<synchronous>, transform_indices = @transform_0, window_bounds = array<i64: 8, 128>}, {pipeline_mode = #tpu.pipeline_mode<synchronous>, transform_indices = @transform_1, window_bounds = array<i64: 8, 128>}, {pipeline_mode = #tpu.pipeline_mode<synchronous>, transform_indices = @transform_2, window_bounds = array<i64: 128, 128>}, {pipeline_mode = #tpu.pipeline_mode<synchronous>, transform_indices = @transform_3, window_bounds = array<i64: 1, 128>}, {pipeline_mode = #tpu.pipeline_mode<synchronous>, transform_indices = @transform_4, window_bounds = array<i64: 8, 128>}]} {
    %c0 = arith.constant 0 : index
    %c0_0 = arith.constant 0 : index
    %0 = vector.load %arg1[%c0, %c0_0] : memref<8x128xf32, #tpu.memory_space<vmem>>, vector<8x128xf32>
    %c0_1 = arith.constant 0 : index
    %c0_2 = arith.constant 0 : index
    %1 = vector.load %arg2[%c0_1, %c0_2] : memref<8x128xf32, #tpu.memory_space<vmem>>, vector<8x128xf32>
    %cst = arith.constant dense<0.000000e+00> : vector<8x8xf32>
    %2 = tpu.matmul %1, %0, %cst {dimension_numbers = #tpu.dot_dimension_numbers<[1], [1], [0], [0], [0, 0, 1, 0], [], []>} : vector<8x128xf32>, vector<8x128xf32>, vector<8x8xf32> -> vector<8x8xf32>
    %cst_3 = arith.constant 2.500000e-01 : f32
    %3 = vector.broadcast %cst_3 : f32 to vector<8x8xf32>
    %4 = arith.mulf %2, %3 : vector<8x8xf32>
    %cst_4 = arith.constant dense<0xFF800000> : vector<8xf32>
    %5 = vector.multi_reduction <maximumf>, %4, %cst_4 [1] : vector<8x8xf32> to vector<8xf32>
    %6 = vector.shape_cast %5 : vector<8xf32> to vector<8x1xf32>
    %7 = vector.broadcast %6 : vector<8x1xf32> to vector<8x8xf32>
    %8 = arith.subf %4, %7 : vector<8x8xf32>
    %9 = math.exp %8 : vector<8x8xf32>
    %cst_5 = arith.constant dense<0.000000e+00> : vector<8xf32>
    %10 = vector.multi_reduction <add>, %9, %cst_5 [1] : vector<8x8xf32> to vector<8xf32>
    %11 = vector.shape_cast %10 : vector<8xf32> to vector<8x1xf32>
    %12 = tpu.reciprocal %11 {approx = true} : vector<8x1xf32> -> vector<8x1xf32>
    %13 = vector.broadcast %12 : vector<8x1xf32> to vector<8x8xf32>
    %14 = arith.mulf %9, %13 : vector<8x8xf32>
    %cst_6 = arith.constant dense<0.000000e+00> : vector<8x128xf32>
    %15 = tpu.matmul %14, %0, %cst_6 {dimension_numbers = #tpu.dot_dimension_numbers<[1], [0], [0], [1], [0, 0, 1, 1], [], []>} : vector<8x8xf32>, vector<8x128xf32>, vector<8x128xf32> -> vector<8x128xf32>
    %16 = tpu.iota {dimensions = array<i32: 0>} : vector<8x128xi32>
    %17 = tpu.iota {dimensions = array<i32: 1>} : vector<8x128xi32>
    %c4_i32 = arith.constant 4 : i32
    %18 = vector.broadcast %c4_i32 : i32 to vector<8x128xi32>
    %19 = arith.muli %16, %18 : vector<8x128xi32>
    %20 = arith.subi %17, %19 : vector<8x128xi32>
    %cst_7 = arith.constant 0.000000e+00 : f32
    %21 = vector.broadcast %cst_7 : f32 to vector<8x128xf32>
    %c0_i32 = arith.constant 0 : i32
    %22 = vector.broadcast %c0_i32 : i32 to vector<8x128xi32>
    %23 = arith.cmpi eq, %20, %22 : vector<8x128xi32>
    %24 = arith.extui %23 : vector<8x128xi1> to vector<8x128xi32>
    %25 = arith.sitofp %24 : vector<8x128xi32> to vector<8x128xf32>
    %cst_8 = arith.constant dense<0.000000e+00> : vector<8x8xf32>
    %26 = tpu.matmul %25, %15, %cst_8 {dimension_numbers = #tpu.dot_dimension_numbers<[1], [1], [0], [0], [0, 0, 1, 0], [], []>} : vector<8x128xf32>, vector<8x128xf32>, vector<8x8xf32> -> vector<8x8xf32>
    %c0_9 = arith.constant 0 : index
    %c0_10 = arith.constant 0 : index
    %27 = vector.load %arg3[%c0_9, %c0_10] : memref<128x128xf32, #tpu.memory_space<vmem>>, vector<8x128xf32>
    %cst_11 = arith.constant dense<0.000000e+00> : vector<8x128xf32>
    %28 = tpu.matmul %26, %27, %cst_11 {dimension_numbers = #tpu.dot_dimension_numbers<[1], [0], [0], [1], [0, 0, 1, 1], [], []>} : vector<8x8xf32>, vector<8x128xf32>, vector<8x128xf32> -> vector<8x128xf32>
    %29 = arith.addf %21, %28 : vector<8x128xf32>
    %c1_i32 = arith.constant 1 : i32
    %30 = vector.broadcast %c1_i32 : i32 to vector<8x128xi32>
    %31 = arith.cmpi eq, %20, %30 : vector<8x128xi32>
    %32 = arith.extui %31 : vector<8x128xi1> to vector<8x128xi32>
    %33 = arith.sitofp %32 : vector<8x128xi32> to vector<8x128xf32>
    %cst_12 = arith.constant dense<0.000000e+00> : vector<8x8xf32>
    %34 = tpu.matmul %33, %15, %cst_12 {dimension_numbers = #tpu.dot_dimension_numbers<[1], [1], [0], [0], [0, 0, 1, 0], [], []>} : vector<8x128xf32>, vector<8x128xf32>, vector<8x8xf32> -> vector<8x8xf32>
    %c8 = arith.constant 8 : index
    %c0_13 = arith.constant 0 : index
    %35 = vector.load %arg3[%c8, %c0_13] : memref<128x128xf32, #tpu.memory_space<vmem>>, vector<8x128xf32>
    %cst_14 = arith.constant dense<0.000000e+00> : vector<8x128xf32>
    %36 = tpu.matmul %34, %35, %cst_14 {dimension_numbers = #tpu.dot_dimension_numbers<[1], [0], [0], [1], [0, 0, 1, 1], [], []>} : vector<8x8xf32>, vector<8x128xf32>, vector<8x128xf32> -> vector<8x128xf32>
    %37 = arith.addf %29, %36 : vector<8x128xf32>
    %c2_i32 = arith.constant 2 : i32
    %38 = vector.broadcast %c2_i32 : i32 to vector<8x128xi32>
    %39 = arith.cmpi eq, %20, %38 : vector<8x128xi32>
    %40 = arith.extui %39 : vector<8x128xi1> to vector<8x128xi32>
    %41 = arith.sitofp %40 : vector<8x128xi32> to vector<8x128xf32>
    %cst_15 = arith.constant dense<0.000000e+00> : vector<8x8xf32>
    %42 = tpu.matmul %41, %15, %cst_15 {dimension_numbers = #tpu.dot_dimension_numbers<[1], [1], [0], [0], [0, 0, 1, 0], [], []>} : vector<8x128xf32>, vector<8x128xf32>, vector<8x8xf32> -> vector<8x8xf32>
    %c16 = arith.constant 16 : index
    %c0_16 = arith.constant 0 : index
    %43 = vector.load %arg3[%c16, %c0_16] : memref<128x128xf32, #tpu.memory_space<vmem>>, vector<8x128xf32>
    %cst_17 = arith.constant dense<0.000000e+00> : vector<8x128xf32>
    %44 = tpu.matmul %42, %43, %cst_17 {dimension_numbers = #tpu.dot_dimension_numbers<[1], [0], [0], [1], [0, 0, 1, 1], [], []>} : vector<8x8xf32>, vector<8x128xf32>, vector<8x128xf32> -> vector<8x128xf32>
    %45 = arith.addf %37, %44 : vector<8x128xf32>
    %c3_i32 = arith.constant 3 : i32
    %46 = vector.broadcast %c3_i32 : i32 to vector<8x128xi32>
    %47 = arith.cmpi eq, %20, %46 : vector<8x128xi32>
    %48 = arith.extui %47 : vector<8x128xi1> to vector<8x128xi32>
    %49 = arith.sitofp %48 : vector<8x128xi32> to vector<8x128xf32>
    %cst_18 = arith.constant dense<0.000000e+00> : vector<8x8xf32>
    %50 = tpu.matmul %49, %15, %cst_18 {dimension_numbers = #tpu.dot_dimension_numbers<[1], [1], [0], [0], [0, 0, 1, 0], [], []>} : vector<8x128xf32>, vector<8x128xf32>, vector<8x8xf32> -> vector<8x8xf32>
    %c24 = arith.constant 24 : index
    %c0_19 = arith.constant 0 : index
    %51 = vector.load %arg3[%c24, %c0_19] : memref<128x128xf32, #tpu.memory_space<vmem>>, vector<8x128xf32>
    %cst_20 = arith.constant dense<0.000000e+00> : vector<8x128xf32>
    %52 = tpu.matmul %50, %51, %cst_20 {dimension_numbers = #tpu.dot_dimension_numbers<[1], [0], [0], [1], [0, 0, 1, 1], [], []>} : vector<8x8xf32>, vector<8x128xf32>, vector<8x128xf32> -> vector<8x128xf32>
    %53 = arith.addf %45, %52 : vector<8x128xf32>
    %c0_21 = arith.constant 0 : index
    %c0_22 = arith.constant 0 : index
    %54 = vector.load %arg4[%c0_21, %c0_22] : memref<1x128xf32, #tpu.memory_space<vmem>>, vector<1x128xf32>
    %55 = vector.broadcast %54 : vector<1x128xf32> to vector<8x128xf32>
    %56 = arith.addf %53, %55 : vector<8x128xf32>
    %c0_23 = arith.constant 0 : index
    %c0_24 = arith.constant 0 : index
    %57 = vector.load %arg5[%c0_23, %c0_24] : memref<8x128xf32, #tpu.memory_space<vmem>>, vector<8x128xf32>
    tpu.vector_store %arg5[%c0_23, %c0_24], %56 {strides = array<i32>} : memref<8x128xf32, #tpu.memory_space<vmem>>, vector<8x128xf32>,
    return
  }
  func.func @transform_0(%arg0: i32) -> (i32, i32) {
    %c0_i32 = arith.constant 0 : i32
    %c0_i32_0 = arith.constant 0 : i32
    %c0_i32_1 = arith.constant 0 : i32
    return %c0_i32, %c0_i32_0 : i32, i32
  }
  func.func @transform_1(%arg0: i32) -> (i32, i32) {
    %c0_i32 = arith.constant 0 : i32
    %c0_i32_0 = arith.constant 0 : i32
    %c0_i32_1 = arith.constant 0 : i32
    return %c0_i32, %c0_i32_0 : i32, i32
  }
  func.func @transform_2(%arg0: i32) -> (i32, i32) {
    %c0_i32 = arith.constant 0 : i32
    %c0_i32_0 = arith.constant 0 : i32
    %c0_i32_1 = arith.constant 0 : i32
    return %c0_i32, %c0_i32_0 : i32, i32
  }
  func.func @transform_3(%arg0: i32) -> (i32, i32) {
    %c0_i32 = arith.constant 0 : i32
    %c0_i32_0 = arith.constant 0 : i32
    %c0_i32_1 = arith.constant 0 : i32
    return %c0_i32, %c0_i32_0 : i32, i32
  }
  func.func @transform_4(%arg0: i32) -> (i32, i32) {
    %c0_i32 = arith.constant 0 : i32
    %c0_i32_0 = arith.constant 0 : i32
    %c0_i32_1 = arith.constant 0 : i32
    return %c0_i32, %c0_i32_0 : i32, i32
  }
}

</mosaic_0001>

<llo_original>
// kernel: attention_forward.1
$region0: #{attention_forward.1}
  #allocation0 [shape = 'u32[]', space=smem, size = 0x4, offset = 0x4, fixed_abs, tag = 'smem constant byte address 0x4 - core index']
  #allocation1 [shape = 'u32[144,128]{1,0:T(1,128)}', space=vmem, size = 0x12000, scoped, tag = 'internal scratch']
  %s0 = inlined_call_operand.vmem [shape: f32[8,128], index: 0, kind: input, shape index: {}]
  %s1 = inlined_call_operand.vmem [shape: f32[8,128], index: 1, kind: input, shape index: {}]
  %s2 = inlined_call_operand.vmem [shape: f32[128,128], index: 2, kind: input, shape index: {}]
  %s3 = inlined_call_operand.vmem [shape: f32[1,128], index: 3, kind: input, shape index: {}]
  %s4 = inlined_call_operand.hbm [shape: f32[8,128], index: 4, kind: output, shape index: {}]
  %s5 = sld [smem:[#allocation0]]
  $region26: #{attention_forward.1} parent=0
    _
  %s7 = ssub.s32 1, %s5
  %s8 = scalar_select 0, %s7, %s5
  $region1: #{attention_forward.1} parent=0
    #allocation2 [shape = 'u8[4096]{0}', space=vmem, size = 0x1000, scoped, tag = 'output window, operand 0, single buffered']
    #allocation3 [shape = 's32[1]{0}', space=sflag, size = 0x4, scoped, tag = 'scoped memory for attention_forward.1']
    %9 = vsyncpa [#allocation3], 0
    // Predicated region
    $region2: #{attention_forward.1} parent=1 // pred_check
      _
    $region3: #{attention_forward.1} parent=1 // pred_check_branch
      %11 = sbr.rel (0) target = $region5
    $region4: #{attention_forward.1} parent=1 // pred_region
      _
    $region5: #{attention_forward.1} parent=1 // pred_fallthru
      _
    // Predicated region
    $region6: #{attention_forward.1} parent=1 // pred_check
      _
    $region7: #{attention_forward.1} parent=1 // pred_check_branch
      %13 = sbr.rel (0) target = $region9
    $region8: #{attention_forward.1} parent=1 // pred_region
      _
    $region9: #{attention_forward.1} parent=1 // pred_fallthru
      _
    // Predicated region
    $region10: #{attention_forward.1} parent=1 // pred_check
      _
    $region11: #{attention_forward.1} parent=1 // pred_check_branch
      %15 = sbr.rel (0) target = $region13
    $region12: #{attention_forward.1} parent=1 // pred_region
      _
    $region13: #{attention_forward.1} parent=1 // pred_fallthru
      _
    // Predicated region
    $region14: #{attention_forward.1} parent=1 // pred_check
      _
    $region15: #{attention_forward.1} parent=1 // pred_check_branch
      %17 = sbr.rel (0) target = $region17
    $region16: #{attention_forward.1} parent=1 // pred_region
      _
    $region17: #{attention_forward.1} parent=1 // pred_fallthru
      _
    %v18 = vld [vmem:[%s0] sm:$0xff]
    %v19 = vld [vmem:[%s1] sm:$0xff]
    %20 = vmatprep.subr.mxu0 0.0
    %21 = vmatpush1.xpose.msra.mxu0 %v18
    %22 = vmatprep.subr.mxu0 0.0
    %23 = vmatpush1.xpose.msra.mxu0 0.0
    %24 = vmatprep.subr.mxu0 0.0
    %25 = vmatpush1.xpose.msra.mxu0 0.0
    %26 = vmatprep.subr.mxu0 0.0
    %27 = vmatpush1.xpose.msra.mxu0 0.0
    %28 = vmatprep.subr.mxu0 0.0
    %29 = vmatpush1.xpose.msra.mxu0 0.0
    %30 = vmatprep.subr.mxu0 0.0
    %31 = vmatpush1.xpose.msra.mxu0 0.0
    %32 = vmatprep.subr.mxu0 0.0
    %33 = vmatpush1.xpose.msra.mxu0 0.0
    %34 = vmatprep.subr.mxu0 0.0
    %35 = vmatpush1.xpose.msra.mxu0 0.0
    %36 = vmatprep.subr.mxu0 0.0
    %37 = vmatpush1.xpose.msra.mxu0 0.0
    %38 = vmatprep.subr.mxu0 0.0
    %39 = vmatpush1.xpose.msra.mxu0 0.0
    %40 = vmatprep.subr.mxu0 0.0
    %41 = vmatpush1.xpose.msra.mxu0 0.0
    %42 = vmatprep.subr.mxu0 0.0
    %43 = vmatpush1.xpose.msra.mxu0 0.0
    %44 = vmatprep.subr.mxu0 0.0
    %45 = vmatpush1.xpose.msra.mxu0 0.0
    %46 = vmatprep.subr.mxu0 0.0
    %47 = vmatpush1.xpose.msra.mxu0 0.0
    %48 = vmatprep.subr.mxu0 0.0
    %49 = vmatpush1.xpose.msra.mxu0 0.0
    %50 = vmatprep.subr.mxu0 0.0
    %51 = vmatpush1.xpose.msra.mxu0 0.0
    %52 = vmatprep.subr.mxu0 0.0
    %53 = vmatpush1.xpose.msra.mxu0 0.0
    %54 = vmatprep.subr.mxu0 0.0
    %55 = vmatpush1.xpose.msra.mxu0 0.0
    %56 = vmatprep.subr.mxu0 0.0
    %57 = vmatpush1.xpose.msra.mxu0 0.0
    %58 = vmatprep.subr.mxu0 0.0
    %59 = vmatpush1.xpose.msra.mxu0 0.0
    %60 = vmatprep.subr.mxu0 0.0
    %61 = vmatpush1.xpose.msra.mxu0 0.0
    %62 = vmatprep.subr.mxu0 0.0
    %63 = vmatpush1.xpose.msra.mxu0 0.0
    %64 = vmatprep.subr.mxu0 0.0
    %65 = vmatpush1.xpose.msra.mxu0 0.0
    %66 = vmatprep.subr.mxu0 0.0
    %67 = vmatpush1.xpose.msra.mxu0 0.0
    %68 = vmatprep.subr.mxu0 0.0
    %69 = vmatpush1.xpose.msra.mxu0 0.0
    %70 = vmatprep.subr.mxu0 0.0
    %71 = vmatpush1.xpose.msra.mxu0 0.0
    %72 = vmatprep.subr.mxu0 0.0
    %73 = vmatpush1.xpose.msra.mxu0 0.0
    %74 = vmatprep.subr.mxu0 0.0
    %75 = vmatpush1.xpose.msra.mxu0 0.0
    %76 = vmatprep.subr.mxu0 0.0
    %77 = vmatpush1.xpose.msra.mxu0 0.0
    %78 = vmatprep.subr.mxu0 0.0
    %79 = vmatpush1.xpose.msra.mxu0 0.0
    %80 = vmatprep.subr.mxu0 0.0
    %81 = vmatpush1.xpose.msra.mxu0 0.0
    %82 = vmatprep.subr.mxu0 0.0
    %83 = vmatpush1.xpose.msra.mxu0 0.0
    %84 = vmatprep.mubr.f32.mxu0 0.0
    %85 = vmatmul.mubr.f32.gmra.mrb[0].mxu0 %v19
    %v86 = vpop.f32.mrb[0].mxu0
    %v87 = vadd.f32 0.0, %v86
    %v88 = vpop.f32.mrb[0].mxu0
    %89 = vdwg.mxu0
    %v90 = vmul.f32 %v87, 0.25
    %vm91 = vcmask 64512
    %v92 = vsel %vm91, %v90, -inf
    %93 = vmax.xlane.f32.xlu0 %v92
    %v94 = vpop.xlane.xlu0 %93
    %v95 = vsub.f32 %v90, %v94
    %v96 = vmul.f32 %v95, 1.442695
    %v97 = vpow.pop %v96
    %v98 = vsel %vm91, %v97, 0.0
    %99 = vadd.xlane.f32.xlu0 %v98
    %v100 = vpop.xlane.xlu0 %99
    %v101 = vrcp.pop %v100
    %v102 = vmul.f32 %v97, %v101
    %v104 = vsel %vm91, %v102, 0
    %106 = vmatprep.subr.mxu0 0.0
    %107 = vmatpush1.msra.mxu0 %v18
    %108 = vmatprep.subr.mxu0 0.0
    %109 = vmatpush1.msra.mxu0 0.0
    %110 = vmatprep.subr.mxu0 0.0
    %111 = vmatpush1.msra.mxu0 0.0
    %112 = vmatprep.subr.mxu0 0.0
    %113 = vmatpush1.msra.mxu0 0.0
    %114 = vmatprep.subr.mxu0 0.0
    %115 = vmatpush1.msra.mxu0 0.0
    %116 = vmatprep.subr.mxu0 0.0
    %117 = vmatpush1.msra.mxu0 0.0
    %118 = vmatprep.subr.mxu0 0.0
    %119 = vmatpush1.msra.mxu0 0.0
    %120 = vmatprep.subr.mxu0 0.0
    %121 = vmatpush1.msra.mxu0 0.0
    %122 = vmatprep.subr.mxu0 0.0
    %123 = vmatpush1.msra.mxu0 0.0
    %124 = vmatprep.subr.mxu0 0.0
    %125 = vmatpush1.msra.mxu0 0.0
    %126 = vmatprep.subr.mxu0 0.0
    %127 = vmatpush1.msra.mxu0 0.0
    %128 = vmatprep.subr.mxu0 0.0
    %129 = vmatpush1.msra.mxu0 0.0
    %130 = vmatprep.subr.mxu0 0.0
    %131 = vmatpush1.msra.mxu0 0.0
    %132 = vmatprep.subr.mxu0 0.0
    %133 = vmatpush1.msra.mxu0 0.0
    %134 = vmatprep.subr.mxu0 0.0
    %135 = vmatpush1.msra.mxu0 0.0
    %136 = vmatprep.subr.mxu0 0.0
    %137 = vmatpush1.msra.mxu0 0.0
    %138 = vmatprep.subr.mxu0 0.0
    %139 = vmatpush1.msra.mxu0 0.0
    %140 = vmatprep.subr.mxu0 0.0
    %141 = vmatpush1.msra.mxu0 0.0
    %142 = vmatprep.subr.mxu0 0.0
    %143 = vmatpush1.msra.mxu0 0.0
    %144 = vmatprep.subr.mxu0 0.0
    %145 = vmatpush1.msra.mxu0 0.0
    %146 = vmatprep.subr.mxu0 0.0
    %147 = vmatpush1.msra.mxu0 0.0
    %148 = vmatprep.subr.mxu0 0.0
    %149 = vmatpush1.msra.mxu0 0.0
    %150 = vmatprep.subr.mxu0 0.0
    %151 = vmatpush1.msra.mxu0 0.0
    %152 = vmatprep.subr.mxu0 0.0
    %153 = vmatpush1.msra.mxu0 0.0
    %154 = vmatprep.subr.mxu0 0.0
    %155 = vmatpush1.msra.mxu0 0.0
    %156 = vmatprep.subr.mxu0 0.0
    %157 = vmatpush1.msra.mxu0 0.0
    %158 = vmatprep.subr.mxu0 0.0
    %159 = vmatpush1.msra.mxu0 0.0
    %160 = vmatprep.subr.mxu0 0.0
    %161 = vmatpush1.msra.mxu0 0.0
    %162 = vmatprep.subr.mxu0 0.0
    %163 = vmatpush1.msra.mxu0 0.0
    %164 = vmatprep.subr.mxu0 0.0
    %165 = vmatpush1.msra.mxu0 0.0
    %166 = vmatprep.subr.mxu0 0.0
    %167 = vmatpush1.msra.mxu0 0.0
    %168 = vmatprep.subr.mxu0 0.0
    %169 = vmatpush1.msra.mxu0 0.0
    %170 = vmatprep.mubr.f32.mxu0 0.0
    %171 = vmatmul.mubr.f32.gmra.mrb[0].mxu0 %v104
    %v172 = vpop.f32.mrb[0].mxu0
    %v173 = vadd.f32 0.0, %v172
    %v174 = vpop.f32.mrb[0].mxu0
    %175 = vdwg.mxu0
    %v176 = vlaneseq
    %v177 = vshrl.u32 %v176, 7
    %v178 = vlaneseq
    %v179 = vand.u32 %v178, 127
    %v180 = vmul.u32 %v177, 4
    %v181 = vsub.s32 %v179, %v180
    %vm182 = vcmp.eq.s32.totalorder %v181, 0
    %v183 = vsel %vm182, 1, 0
    %v184 = vcvt.s32.f32 %v183
    %185 = vmatprep.subr.mxu0 0.0
    %186 = vmatpush1.xpose.msra.mxu0 %v173
    %187 = vmatprep.subr.mxu0 0.0
    %188 = vmatpush1.xpose.msra.mxu0 0.0
    %189 = vmatprep.subr.mxu0 0.0
    %190 = vmatpush1.xpose.msra.mxu0 0.0
    %191 = vmatprep.subr.mxu0 0.0
    %192 = vmatpush1.xpose.msra.mxu0 0.0
    %193 = vmatprep.subr.mxu0 0.0
    %194 = vmatpush1.xpose.msra.mxu0 0.0
    %195 = vmatprep.subr.mxu0 0.0
    %196 = vmatpush1.xpose.msra.mxu0 0.0
    %197 = vmatprep.subr.mxu0 0.0
    %198 = vmatpush1.xpose.msra.mxu0 0.0
    %199 = vmatprep.subr.mxu0 0.0
    %200 = vmatpush1.xpose.msra.mxu0 0.0
    %201 = vmatprep.subr.mxu0 0.0
    %202 = vmatpush1.xpose.msra.mxu0 0.0
    %203 = vmatprep.subr.mxu0 0.0
    %204 = vmatpush1.xpose.msra.mxu0 0.0
    %205 = vmatprep.subr.mxu0 0.0
    %206 = vmatpush1.xpose.msra.mxu0 0.0
    %207 = vmatprep.subr.mxu0 0.0
    %208 = vmatpush1.xpose.msra.mxu0 0.0
    %209 = vmatprep.subr.mxu0 0.0
    %210 = vmatpush1.xpose.msra.mxu0 0.0
    %211 = vmatprep.subr.mxu0 0.0
    %212 = vmatpush1.xpose.msra.mxu0 0.0
    %213 = vmatprep.subr.mxu0 0.0
    %214 = vmatpush1.xpose.msra.mxu0 0.0
    %215 = vmatprep.subr.mxu0 0.0
    %216 = vmatpush1.xpose.msra.mxu0 0.0
    %217 = vmatprep.subr.mxu0 0.0
    %218 = vmatpush1.xpose.msra.mxu0 0.0
    %219 = vmatprep.subr.mxu0 0.0
    %220 = vmatpush1.xpose.msra.mxu0 0.0
    %221 = vmatprep.subr.mxu0 0.0
    %222 = vmatpush1.xpose.msra.mxu0 0.0
    %223 = vmatprep.subr.mxu0 0.0
    %224 = vmatpush1.xpose.msra.mxu0 0.0
    %225 = vmatprep.subr.mxu0 0.0
    %226 = vmatpush1.xpose.msra.mxu0 0.0
    %227 = vmatprep.subr.mxu0 0.0
    %228 = vmatpush1.xpose.msra.mxu0 0.0
    %229 = vmatprep.subr.mxu0 0.0
    %230 = vmatpush1.xpose.msra.mxu0 0.0
    %231 = vmatprep.subr.mxu0 0.0
    %232 = vmatpush1.xpose.msra.mxu0 0.0
    %233 = vmatprep.subr.mxu0 0.0
    %234 = vmatpush1.xpose.msra.mxu0 0.0
    %235 = vmatprep.subr.mxu0 0.0
    %236 = vmatpush1.xpose.msra.mxu0 0.0
    %237 = vmatprep.subr.mxu0 0.0
    %238 = vmatpush1.xpose.msra.mxu0 0.0
    %239 = vmatprep.subr.mxu0 0.0
    %240 = vmatpush1.xpose.msra.mxu0 0.0
    %241 = vmatprep.subr.mxu0 0.0
    %242 = vmatpush1.xpose.msra.mxu0 0.0
    %243 = vmatprep.subr.mxu0 0.0
    %244 = vmatpush1.xpose.msra.mxu0 0.0
    %245 = vmatprep.subr.mxu0 0.0
    %246 = vmatpush1.xpose.msra.mxu0 0.0
    %247 = vmatprep.subr.mxu0 0.0
    %248 = vmatpush1.xpose.msra.mxu0 0.0
    %249 = vmatprep.mubr.f32.mxu0 0.0
    %250 = vmatmul.mubr.f32.gmra.mrb[0].mxu0 %v184
    %v251 = vpop.f32.mrb[0].mxu0
    %v252 = vadd.f32 0.0, %v251
    %v253 = vpop.f32.mrb[0].mxu0
    %254 = vdwg.mxu0
    %v255 = vld [vmem:[%s2] sm:$0xff]
    %vm256 = vcmp.eq.s32.totalorder %v181, 1
    %v257 = vsel %vm256, 1, 0
    %v258 = vcvt.s32.f32 %v257
    %259 = vmatprep.subr.mxu0 0.0
    %260 = vmatpush1.xpose.msra.mxu0 %v173
    %261 = vmatprep.subr.mxu0 0.0
    %262 = vmatpush1.xpose.msra.mxu0 0.0
    %263 = vmatprep.subr.mxu0 0.0
    %264 = vmatpush1.xpose.msra.mxu0 0.0
    %265 = vmatprep.subr.mxu0 0.0
    %266 = vmatpush1.xpose.msra.mxu0 0.0
    %267 = vmatprep.subr.mxu0 0.0
    %268 = vmatpush1.xpose.msra.mxu0 0.0
    %269 = vmatprep.subr.mxu0 0.0
    %270 = vmatpush1.xpose.msra.mxu0 0.0
    %271 = vmatprep.subr.mxu0 0.0
    %272 = vmatpush1.xpose.msra.mxu0 0.0
    %273 = vmatprep.subr.mxu0 0.0
    %274 = vmatpush1.xpose.msra.mxu0 0.0
    %275 = vmatprep.subr.mxu0 0.0
    %276 = vmatpush1.xpose.msra.mxu0 0.0
    %277 = vmatprep.subr.mxu0 0.0
    %278 = vmatpush1.xpose.msra.mxu0 0.0
    %279 = vmatprep.subr.mxu0 0.0
    %280 = vmatpush1.xpose.msra.mxu0 0.0
    %281 = vmatprep.subr.mxu0 0.0
    %282 = vmatpush1.xpose.msra.mxu0 0.0
    %283 = vmatprep.subr.mxu0 0.0
    %284 = vmatpush1.xpose.msra.mxu0 0.0
    %285 = vmatprep.subr.mxu0 0.0
    %286 = vmatpush1.xpose.msra.mxu0 0.0
    %287 = vmatprep.subr.mxu0 0.0
    %288 = vmatpush1.xpose.msra.mxu0 0.0
    %289 = vmatprep.subr.mxu0 0.0
    %290 = vmatpush1.xpose.msra.mxu0 0.0
    %291 = vmatprep.subr.mxu0 0.0
    %292 = vmatpush1.xpose.msra.mxu0 0.0
    %293 = vmatprep.subr.mxu0 0.0
    %294 = vmatpush1.xpose.msra.mxu0 0.0
    %295 = vmatprep.subr.mxu0 0.0
    %296 = vmatpush1.xpose.msra.mxu0 0.0
    %297 = vmatprep.subr.mxu0 0.0
    %298 = vmatpush1.xpose.msra.mxu0 0.0
    %299 = vmatprep.subr.mxu0 0.0
    %300 = vmatpush1.xpose.msra.mxu0 0.0
    %301 = vmatprep.subr.mxu0 0.0
    %302 = vmatpush1.xpose.msra.mxu0 0.0
    %303 = vmatprep.subr.mxu0 0.0
    %304 = vmatpush1.xpose.msra.mxu0 0.0
    %305 = vmatprep.subr.mxu0 0.0
    %306 = vmatpush1.xpose.msra.mxu0 0.0
    %307 = vmatprep.subr.mxu0 0.0
    %308 = vmatpush1.xpose.msra.mxu0 0.0
    %309 = vmatprep.subr.mxu0 0.0
    %310 = vmatpush1.xpose.msra.mxu0 0.0
    %311 = vmatprep.subr.mxu0 0.0
    %312 = vmatpush1.xpose.msra.mxu0 0.0
    %313 = vmatprep.subr.mxu0 0.0
    %314 = vmatpush1.xpose.msra.mxu0 0.0
    %315 = vmatprep.subr.mxu0 0.0
    %316 = vmatpush1.xpose.msra.mxu0 0.0
    %317 = vmatprep.subr.mxu0 0.0
    %318 = vmatpush1.xpose.msra.mxu0 0.0
    %319 = vmatprep.subr.mxu0 0.0
    %320 = vmatpush1.xpose.msra.mxu0 0.0
    %321 = vmatprep.subr.mxu0 0.0
    %322 = vmatpush1.xpose.msra.mxu0 0.0
    %323 = vmatprep.mubr.f32.mxu0 0.0
    %324 = vmatmul.mubr.f32.gmra.mrb[0].mxu0 %v258
    %v325 = vpop.f32.mrb[0].mxu0
    %v326 = vadd.f32 0.0, %v325
    %v327 = vpop.f32.mrb[0].mxu0
    %328 = vdwg.mxu0
    %v329 = vld [vmem:[%s2 + $0x8] sm:$0xff]
    %v331 = vsel %vm91, %v326, 0
    %333 = vmatprep.subr.mxu0 0.0
    %334 = vmatpush1.msra.mxu0 %v329
    %335 = vmatprep.subr.mxu0 0.0
    %336 = vmatpush1.msra.mxu0 0.0
    %337 = vmatprep.subr.mxu0 0.0
    %338 = vmatpush1.msra.mxu0 0.0
    %339 = vmatprep.subr.mxu0 0.0
    %340 = vmatpush1.msra.mxu0 0.0
    %341 = vmatprep.subr.mxu0 0.0
    %342 = vmatpush1.msra.mxu0 0.0
    %343 = vmatprep.subr.mxu0 0.0
    %344 = vmatpush1.msra.mxu0 0.0
    %345 = vmatprep.subr.mxu0 0.0
    %346 = vmatpush1.msra.mxu0 0.0
    %347 = vmatprep.subr.mxu0 0.0
    %348 = vmatpush1.msra.mxu0 0.0
    %349 = vmatprep.subr.mxu0 0.0
    %350 = vmatpush1.msra.mxu0 0.0
    %351 = vmatprep.subr.mxu0 0.0
    %352 = vmatpush1.msra.mxu0 0.0
    %353 = vmatprep.subr.mxu0 0.0
    %354 = vmatpush1.msra.mxu0 0.0
    %355 = vmatprep.subr.mxu0 0.0
    %356 = vmatpush1.msra.mxu0 0.0
    %357 = vmatprep.subr.mxu0 0.0
    %358 = vmatpush1.msra.mxu0 0.0
    %359 = vmatprep.subr.mxu0 0.0
    %360 = vmatpush1.msra.mxu0 0.0
    %361 = vmatprep.subr.mxu0 0.0
    %362 = vmatpush1.msra.mxu0 0.0
    %363 = vmatprep.subr.mxu0 0.0
    %364 = vmatpush1.msra.mxu0 0.0
    %365 = vmatprep.subr.mxu0 0.0
    %366 = vmatpush1.msra.mxu0 0.0
    %367 = vmatprep.subr.mxu0 0.0
    %368 = vmatpush1.msra.mxu0 0.0
    %369 = vmatprep.subr.mxu0 0.0
    %370 = vmatpush1.msra.mxu0 0.0
    %371 = vmatprep.subr.mxu0 0.0
    %372 = vmatpush1.msra.mxu0 0.0
    %373 = vmatprep.subr.mxu0 0.0
    %374 = vmatpush1.msra.mxu0 0.0
    %375 = vmatprep.subr.mxu0 0.0
    %376 = vmatpush1.msra.mxu0 0.0
    %377 = vmatprep.subr.mxu0 0.0
    %378 = vmatpush1.msra.mxu0 0.0
    %379 = vmatprep.subr.mxu0 0.0
    %380 = vmatpush1.msra.mxu0 0.0
    %381 = vmatprep.subr.mxu0 0.0
    %382 = vmatpush1.msra.mxu0 0.0
    %383 = vmatprep.subr.mxu0 0.0
    %384 = vmatpush1.msra.mxu0 0.0
    %385 = vmatprep.subr.mxu0 0.0
    %386 = vmatpush1.msra.mxu0 0.0
    %387 = vmatprep.subr.mxu0 0.0
    %388 = vmatpush1.msra.mxu0 0.0
    %389 = vmatprep.subr.mxu0 0.0
    %390 = vmatpush1.msra.mxu0 0.0
    %391 = vmatprep.subr.mxu0 0.0
    %392 = vmatpush1.msra.mxu0 0.0
    %393 = vmatprep.subr.mxu0 0.0
    %394 = vmatpush1.msra.mxu0 0.0
    %395 = vmatprep.subr.mxu0 0.0
    %396 = vmatpush1.msra.mxu0 0.0
    %397 = vmatprep.mubr.f32.mxu0 0.0
    %398 = vmatmul.mubr.f32.gmra.mrb[0].mxu0 %v331
    %v399 = vpop.f32.mrb[0].mxu0
    %v400 = vadd.f32 0.0, %v399
    %v401 = vpop.f32.mrb[0].mxu0
    %402 = vdwg.mxu0
    %v404 = vsel %vm91, %v252, 0
    %406 = vmatprep.subr.mxu0 0.0
    %407 = vmatpush1.msra.mxu0 %v255
    %408 = vmatprep.subr.mxu0 0.0
    %409 = vmatpush1.msra.mxu0 0.0
    %410 = vmatprep.subr.mxu0 0.0
    %411 = vmatpush1.msra.mxu0 0.0
    %412 = vmatprep.subr.mxu0 0.0
    %413 = vmatpush1.msra.mxu0 0.0
    %414 = vmatprep.subr.mxu0 0.0
    %415 = vmatpush1.msra.mxu0 0.0
    %416 = vmatprep.subr.mxu0 0.0
    %417 = vmatpush1.msra.mxu0 0.0
    %418 = vmatprep.subr.mxu0 0.0
    %419 = vmatpush1.msra.mxu0 0.0
    %420 = vmatprep.subr.mxu0 0.0
    %421 = vmatpush1.msra.mxu0 0.0
    %422 = vmatprep.subr.mxu0 0.0
    %423 = vmatpush1.msra.mxu0 0.0
    %424 = vmatprep.subr.mxu0 0.0
    %425 = vmatpush1.msra.mxu0 0.0
    %426 = vmatprep.subr.mxu0 0.0
    %427 = vmatpush1.msra.mxu0 0.0
    %428 = vmatprep.subr.mxu0 0.0
    %429 = vmatpush1.msra.mxu0 0.0
    %430 = vmatprep.subr.mxu0 0.0
    %431 = vmatpush1.msra.mxu0 0.0
    %432 = vmatprep.subr.mxu0 0.0
    %433 = vmatpush1.msra.mxu0 0.0
    %434 = vmatprep.subr.mxu0 0.0
    %435 = vmatpush1.msra.mxu0 0.0
    %436 = vmatprep.subr.mxu0 0.0
    %437 = vmatpush1.msra.mxu0 0.0
    %438 = vmatprep.subr.mxu0 0.0
    %439 = vmatpush1.msra.mxu0 0.0
    %440 = vmatprep.subr.mxu0 0.0
    %441 = vmatpush1.msra.mxu0 0.0
    %442 = vmatprep.subr.mxu0 0.0
    %443 = vmatpush1.msra.mxu0 0.0
    %444 = vmatprep.subr.mxu0 0.0
    %445 = vmatpush1.msra.mxu0 0.0
    %446 = vmatprep.subr.mxu0 0.0
    %447 = vmatpush1.msra.mxu0 0.0
    %448 = vmatprep.subr.mxu0 0.0
    %449 = vmatpush1.msra.mxu0 0.0
    %450 = vmatprep.subr.mxu0 0.0
    %451 = vmatpush1.msra.mxu0 0.0
    %452 = vmatprep.subr.mxu0 0.0
    %453 = vmatpush1.msra.mxu0 0.0
    %454 = vmatprep.subr.mxu0 0.0
    %455 = vmatpush1.msra.mxu0 0.0
    %456 = vmatprep.subr.mxu0 0.0
    %457 = vmatpush1.msra.mxu0 0.0
    %458 = vmatprep.subr.mxu0 0.0
    %459 = vmatpush1.msra.mxu0 0.0
    %460 = vmatprep.subr.mxu0 0.0
    %461 = vmatpush1.msra.mxu0 0.0
    %462 = vmatprep.subr.mxu0 0.0
    %463 = vmatpush1.msra.mxu0 0.0
    %464 = vmatprep.subr.mxu0 0.0
    %465 = vmatpush1.msra.mxu0 0.0
    %466 = vmatprep.subr.mxu0 0.0
    %467 = vmatpush1.msra.mxu0 0.0
    %468 = vmatprep.subr.mxu0 0.0
    %469 = vmatpush1.msra.mxu0 0.0
    %470 = vmatprep.mubr.f32.mxu0 0.0
    %471 = vmatmul.mubr.f32.gmra.mrb[0].mxu0 %v404
    %v472 = vpop.f32.mrb[0].mxu0
    %v473 = vadd.f32 %v400, %v472
    %v474 = vpop.f32.mrb[0].mxu0
    %475 = vdwg.mxu0
    %vm476 = vcmp.eq.s32.totalorder %v181, 2
    %v477 = vsel %vm476, 1, 0
    %v478 = vcvt.s32.f32 %v477
    %479 = vmatprep.subr.mxu0 0.0
    %480 = vmatpush1.xpose.msra.mxu0 %v173
    %481 = vmatprep.subr.mxu0 0.0
    %482 = vmatpush1.xpose.msra.mxu0 0.0
    %483 = vmatprep.subr.mxu0 0.0
    %484 = vmatpush1.xpose.msra.mxu0 0.0
    %485 = vmatprep.subr.mxu0 0.0
    %486 = vmatpush1.xpose.msra.mxu0 0.0
    %487 = vmatprep.subr.mxu0 0.0
    %488 = vmatpush1.xpose.msra.mxu0 0.0
    %489 = vmatprep.subr.mxu0 0.0
    %490 = vmatpush1.xpose.msra.mxu0 0.0
    %491 = vmatprep.subr.mxu0 0.0
    %492 = vmatpush1.xpose.msra.mxu0 0.0
    %493 = vmatprep.subr.mxu0 0.0
    %494 = vmatpush1.xpose.msra.mxu0 0.0
    %495 = vmatprep.subr.mxu0 0.0
    %496 = vmatpush1.xpose.msra.mxu0 0.0
    %497 = vmatprep.subr.mxu0 0.0
    %498 = vmatpush1.xpose.msra.mxu0 0.0
    %499 = vmatprep.subr.mxu0 0.0
    %500 = vmatpush1.xpose.msra.mxu0 0.0
    %501 = vmatprep.subr.mxu0 0.0
    %502 = vmatpush1.xpose.msra.mxu0 0.0
    %503 = vmatprep.subr.mxu0 0.0
    %504 = vmatpush1.xpose.msra.mxu0 0.0
    %505 = vmatprep.subr.mxu0 0.0
    %506 = vmatpush1.xpose.msra.mxu0 0.0
    %507 = vmatprep.subr.mxu0 0.0
    %508 = vmatpush1.xpose.msra.mxu0 0.0
    %509 = vmatprep.subr.mxu0 0.0
    %510 = vmatpush1.xpose.msra.mxu0 0.0
    %511 = vmatprep.subr.mxu0 0.0
    %512 = vmatpush1.xpose.msra.mxu0 0.0
    %513 = vmatprep.subr.mxu0 0.0
    %514 = vmatpush1.xpose.msra.mxu0 0.0
    %515 = vmatprep.subr.mxu0 0.0
    %516 = vmatpush1.xpose.msra.mxu0 0.0
    %517 = vmatprep.subr.mxu0 0.0
    %518 = vmatpush1.xpose.msra.mxu0 0.0
    %519 = vmatprep.subr.mxu0 0.0
    %520 = vmatpush1.xpose.msra.mxu0 0.0
    %521 = vmatprep.subr.mxu0 0.0
    %522 = vmatpush1.xpose.msra.mxu0 0.0
    %523 = vmatprep.subr.mxu0 0.0
    %524 = vmatpush1.xpose.msra.mxu0 0.0
    %525 = vmatprep.subr.mxu0 0.0
    %526 = vmatpush1.xpose.msra.mxu0 0.0
    %527 = vmatprep.subr.mxu0 0.0
    %528 = vmatpush1.xpose.msra.mxu0 0.0
    %529 = vmatprep.subr.mxu0 0.0
    %530 = vmatpush1.xpose.msra.mxu0 0.0
    %531 = vmatprep.subr.mxu0 0.0
    %532 = vmatpush1.xpose.msra.mxu0 0.0
    %533 = vmatprep.subr.mxu0 0.0
    %534 = vmatpush1.xpose.msra.mxu0 0.0
    %535 = vmatprep.subr.mxu0 0.0
    %536 = vmatpush1.xpose.msra.mxu0 0.0
    %537 = vmatprep.subr.mxu0 0.0
    %538 = vmatpush1.xpose.msra.mxu0 0.0
    %539 = vmatprep.subr.mxu0 0.0
    %540 = vmatpush1.xpose.msra.mxu0 0.0
    %541 = vmatprep.subr.mxu0 0.0
    %542 = vmatpush1.xpose.msra.mxu0 0.0
    %543 = vmatprep.mubr.f32.mxu0 0.0
    %544 = vmatmul.mubr.f32.gmra.mrb[0].mxu0 %v478
    %v545 = vpop.f32.mrb[0].mxu0
    %v546 = vadd.f32 0.0, %v545
    %v547 = vpop.f32.mrb[0].mxu0
    %548 = vdwg.mxu0
    %v549 = vld [vmem:[%s2 + $0x10] sm:$0xff]
    %v551 = vsel %vm91, %v546, 0
    %553 = vmatprep.subr.mxu0 0.0
    %554 = vmatpush1.msra.mxu0 %v549
    %555 = vmatprep.subr.mxu0 0.0
    %556 = vmatpush1.msra.mxu0 0.0
    %557 = vmatprep.subr.mxu0 0.0
    %558 = vmatpush1.msra.mxu0 0.0
    %559 = vmatprep.subr.mxu0 0.0
    %560 = vmatpush1.msra.mxu0 0.0
    %561 = vmatprep.subr.mxu0 0.0
    %562 = vmatpush1.msra.mxu0 0.0
    %563 = vmatprep.subr.mxu0 0.0
    %564 = vmatpush1.msra.mxu0 0.0
    %565 = vmatprep.subr.mxu0 0.0
    %566 = vmatpush1.msra.mxu0 0.0
    %567 = vmatprep.subr.mxu0 0.0
    %568 = vmatpush1.msra.mxu0 0.0
    %569 = vmatprep.subr.mxu0 0.0
    %570 = vmatpush1.msra.mxu0 0.0
    %571 = vmatprep.subr.mxu0 0.0
    %572 = vmatpush1.msra.mxu0 0.0
    %573 = vmatprep.subr.mxu0 0.0
    %574 = vmatpush1.msra.mxu0 0.0
    %575 = vmatprep.subr.mxu0 0.0
    %576 = vmatpush1.msra.mxu0 0.0
    %577 = vmatprep.subr.mxu0 0.0
    %578 = vmatpush1.msra.mxu0 0.0
    %579 = vmatprep.subr.mxu0 0.0
    %580 = vmatpush1.msra.mxu0 0.0
    %581 = vmatprep.subr.mxu0 0.0
    %582 = vmatpush1.msra.mxu0 0.0
    %583 = vmatprep.subr.mxu0 0.0
    %584 = vmatpush1.msra.mxu0 0.0
    %585 = vmatprep.subr.mxu0 0.0
    %586 = vmatpush1.msra.mxu0 0.0
    %587 = vmatprep.subr.mxu0 0.0
    %588 = vmatpush1.msra.mxu0 0.0
    %589 = vmatprep.subr.mxu0 0.0
    %590 = vmatpush1.msra.mxu0 0.0
    %591 = vmatprep.subr.mxu0 0.0
    %592 = vmatpush1.msra.mxu0 0.0
    %593 = vmatprep.subr.mxu0 0.0
    %594 = vmatpush1.msra.mxu0 0.0
    %595 = vmatprep.subr.mxu0 0.0
    %596 = vmatpush1.msra.mxu0 0.0
    %597 = vmatprep.subr.mxu0 0.0
    %598 = vmatpush1.msra.mxu0 0.0
    %599 = vmatprep.subr.mxu0 0.0
    %600 = vmatpush1.msra.mxu0 0.0
    %601 = vmatprep.subr.mxu0 0.0
    %602 = vmatpush1.msra.mxu0 0.0
    %603 = vmatprep.subr.mxu0 0.0
    %604 = vmatpush1.msra.mxu0 0.0
    %605 = vmatprep.subr.mxu0 0.0
    %606 = vmatpush1.msra.mxu0 0.0
    %607 = vmatprep.subr.mxu0 0.0
    %608 = vmatpush1.msra.mxu0 0.0
    %609 = vmatprep.subr.mxu0 0.0
    %610 = vmatpush1.msra.mxu0 0.0
    %611 = vmatprep.subr.mxu0 0.0
    %612 = vmatpush1.msra.mxu0 0.0
    %613 = vmatprep.subr.mxu0 0.0
    %614 = vmatpush1.msra.mxu0 0.0
    %615 = vmatprep.subr.mxu0 0.0
    %616 = vmatpush1.msra.mxu0 0.0
    %617 = vmatprep.mubr.f32.mxu0 0.0
    %618 = vmatmul.mubr.f32.gmra.mrb[0].mxu0 %v551
    %v619 = vpop.f32.mrb[0].mxu0
    %v620 = vadd.f32 0.0, %v619
    %v621 = vpop.f32.mrb[0].mxu0
    %622 = vdwg.mxu0
    %v623 = vadd.f32 %v473, %v620
    %vm624 = vcmp.eq.s32.totalorder %v181, 3
    %v625 = vsel %vm624, 1, 0
    %v626 = vcvt.s32.f32 %v625
    %627 = vmatprep.subr.mxu0 0.0
    %628 = vmatpush1.xpose.msra.mxu0 %v173
    %629 = vmatprep.subr.mxu0 0.0
    %630 = vmatpush1.xpose.msra.mxu0 0.0
    %631 = vmatprep.subr.mxu0 0.0
    %632 = vmatpush1.xpose.msra.mxu0 0.0
    %633 = vmatprep.subr.mxu0 0.0
    %634 = vmatpush1.xpose.msra.mxu0 0.0
    %635 = vmatprep.subr.mxu0 0.0
    %636 = vmatpush1.xpose.msra.mxu0 0.0
    %637 = vmatprep.subr.mxu0 0.0
    %638 = vmatpush1.xpose.msra.mxu0 0.0
    %639 = vmatprep.subr.mxu0 0.0
    %640 = vmatpush1.xpose.msra.mxu0 0.0
    %641 = vmatprep.subr.mxu0 0.0
    %642 = vmatpush1.xpose.msra.mxu0 0.0
    %643 = vmatprep.subr.mxu0 0.0
    %644 = vmatpush1.xpose.msra.mxu0 0.0
    %645 = vmatprep.subr.mxu0 0.0
    %646 = vmatpush1.xpose.msra.mxu0 0.0
    %647 = vmatprep.subr.mxu0 0.0
    %648 = vmatpush1.xpose.msra.mxu0 0.0
    %649 = vmatprep.subr.mxu0 0.0
    %650 = vmatpush1.xpose.msra.mxu0 0.0
    %651 = vmatprep.subr.mxu0 0.0
    %652 = vmatpush1.xpose.msra.mxu0 0.0
    %653 = vmatprep.subr.mxu0 0.0
    %654 = vmatpush1.xpose.msra.mxu0 0.0
    %655 = vmatprep.subr.mxu0 0.0
    %656 = vmatpush1.xpose.msra.mxu0 0.0
    %657 = vmatprep.subr.mxu0 0.0
    %658 = vmatpush1.xpose.msra.mxu0 0.0
    %659 = vmatprep.subr.mxu0 0.0
    %660 = vmatpush1.xpose.msra.mxu0 0.0
    %661 = vmatprep.subr.mxu0 0.0
    %662 = vmatpush1.xpose.msra.mxu0 0.0
    %663 = vmatprep.subr.mxu0 0.0
    %664 = vmatpush1.xpose.msra.mxu0 0.0
    %665 = vmatprep.subr.mxu0 0.0
    %666 = vmatpush1.xpose.msra.mxu0 0.0
    %667 = vmatprep.subr.mxu0 0.0
    %668 = vmatpush1.xpose.msra.mxu0 0.0
    %669 = vmatprep.subr.mxu0 0.0
    %670 = vmatpush1.xpose.msra.mxu0 0.0
    %671 = vmatprep.subr.mxu0 0.0
    %672 = vmatpush1.xpose.msra.mxu0 0.0
    %673 = vmatprep.subr.mxu0 0.0
    %674 = vmatpush1.xpose.msra.mxu0 0.0
    %675 = vmatprep.subr.mxu0 0.0
    %676 = vmatpush1.xpose.msra.mxu0 0.0
    %677 = vmatprep.subr.mxu0 0.0
    %678 = vmatpush1.xpose.msra.mxu0 0.0
    %679 = vmatprep.subr.mxu0 0.0
    %680 = vmatpush1.xpose.msra.mxu0 0.0
    %681 = vmatprep.subr.mxu0 0.0
    %682 = vmatpush1.xpose.msra.mxu0 0.0
    %683 = vmatprep.subr.mxu0 0.0
    %684 = vmatpush1.xpose.msra.mxu0 0.0
    %685 = vmatprep.subr.mxu0 0.0
    %686 = vmatpush1.xpose.msra.mxu0 0.0
    %687 = vmatprep.subr.mxu0 0.0
    %688 = vmatpush1.xpose.msra.mxu0 0.0
    %689 = vmatprep.subr.mxu0 0.0
    %690 = vmatpush1.xpose.msra.mxu0 0.0
    %691 = vmatprep.mubr.f32.mxu0 0.0
    %692 = vmatmul.mubr.f32.gmra.mrb[0].mxu0 %v626
    %v693 = vpop.f32.mrb[0].mxu0
    %v694 = vadd.f32 0.0, %v693
    %v695 = vpop.f32.mrb[0].mxu0
    %696 = vdwg.mxu0
    %v697 = vld [vmem:[%s2 + $0x18] sm:$0xff]
    %v699 = vsel %vm91, %v694, 0
    %701 = vmatprep.subr.mxu0 0.0
    %702 = vmatpush1.msra.mxu0 %v697
    %703 = vmatprep.subr.mxu0 0.0
    %704 = vmatpush1.msra.mxu0 0.0
    %705 = vmatprep.subr.mxu0 0.0
    %706 = vmatpush1.msra.mxu0 0.0
    %707 = vmatprep.subr.mxu0 0.0
    %708 = vmatpush1.msra.mxu0 0.0
    %709 = vmatprep.subr.mxu0 0.0
    %710 = vmatpush1.msra.mxu0 0.0
    %711 = vmatprep.subr.mxu0 0.0
    %712 = vmatpush1.msra.mxu0 0.0
    %713 = vmatprep.subr.mxu0 0.0
    %714 = vmatpush1.msra.mxu0 0.0
    %715 = vmatprep.subr.mxu0 0.0
    %716 = vmatpush1.msra.mxu0 0.0
    %717 = vmatprep.subr.mxu0 0.0
    %718 = vmatpush1.msra.mxu0 0.0
    %719 = vmatprep.subr.mxu0 0.0
    %720 = vmatpush1.msra.mxu0 0.0
    %721 = vmatprep.subr.mxu0 0.0
    %722 = vmatpush1.msra.mxu0 0.0
    %723 = vmatprep.subr.mxu0 0.0
    %724 = vmatpush1.msra.mxu0 0.0
    %725 = vmatprep.subr.mxu0 0.0
    %726 = vmatpush1.msra.mxu0 0.0
    %727 = vmatprep.subr.mxu0 0.0
    %728 = vmatpush1.msra.mxu0 0.0
    %729 = vmatprep.subr.mxu0 0.0
    %730 = vmatpush1.msra.mxu0 0.0
    %731 = vmatprep.subr.mxu0 0.0
    %732 = vmatpush1.msra.mxu0 0.0
    %733 = vmatprep.subr.mxu0 0.0
    %734 = vmatpush1.msra.mxu0 0.0
    %735 = vmatprep.subr.mxu0 0.0
    %736 = vmatpush1.msra.mxu0 0.0
    %737 = vmatprep.subr.mxu0 0.0
    %738 = vmatpush1.msra.mxu0 0.0
    %739 = vmatprep.subr.mxu0 0.0
    %740 = vmatpush1.msra.mxu0 0.0
    %741 = vmatprep.subr.mxu0 0.0
    %742 = vmatpush1.msra.mxu0 0.0
    %743 = vmatprep.subr.mxu0 0.0
    %744 = vmatpush1.msra.mxu0 0.0
    %745 = vmatprep.subr.mxu0 0.0
    %746 = vmatpush1.msra.mxu0 0.0
    %747 = vmatprep.subr.mxu0 0.0
    %748 = vmatpush1.msra.mxu0 0.0
    %749 = vmatprep.subr.mxu0 0.0
    %750 = vmatpush1.msra.mxu0 0.0
    %751 = vmatprep.subr.mxu0 0.0
    %752 = vmatpush1.msra.mxu0 0.0
    %753 = vmatprep.subr.mxu0 0.0
    %754 = vmatpush1.msra.mxu0 0.0
    %755 = vmatprep.subr.mxu0 0.0
    %756 = vmatpush1.msra.mxu0 0.0
    %757 = vmatprep.subr.mxu0 0.0
    %758 = vmatpush1.msra.mxu0 0.0
    %759 = vmatprep.subr.mxu0 0.0
    %760 = vmatpush1.msra.mxu0 0.0
    %761 = vmatprep.subr.mxu0 0.0
    %762 = vmatpush1.msra.mxu0 0.0
    %763 = vmatprep.subr.mxu0 0.0
    %764 = vmatpush1.msra.mxu0 0.0
    %765 = vmatprep.mubr.f32.mxu0 0.0
    %766 = vmatmul.mubr.f32.gmra.mrb[0].mxu0 %v699
    %v767 = vpop.f32.mrb[0].mxu0
    %v768 = vadd.f32 0.0, %v767
    %v769 = vpop.f32.mrb[0].mxu0
    %770 = vdwg.mxu0
    %v771 = vadd.f32 %v623, %v768
    %v772 = vld [vmem:[%s3] sm:$0x1]
    %v774 = vlaneseq
    %v775 = vshrl.u32 %v774, 7
    %v776 = vsub.s32 0, %v775
    %v777 = vrot.slane %v772, %v776
    %v779 = vadd.f32 %v771, %v777
    %780 = vst [vmem:[#allocation2] sm:$0xff] %v779
    // Predicated region
    $region18: #{attention_forward.1} parent=1 // pred_check
      _
    $region19: #{attention_forward.1} parent=1 // pred_check_branch
      %782 = sbr.rel (0) target = $region21
    $region20: #{attention_forward.1} parent=1 // pred_region
      %s784 = ssub.s32 128, 128
      %785 = vsyncadd [#allocation3], %s784
      %s787 = sshll.u32 [#allocation2], 4
      %s788 = int_to_ptr.vmem [resolvable:$true] %s787
      %790 = dma.vmem_to_hbm [thread:$0]  %s788, 128, %s4, [#allocation3]
    $region21: #{attention_forward.1} parent=1 // pred_fallthru
      _
    // Predicated region
    $region22: #{attention_forward.1} parent=1 // pred_check
      _
    $region23: #{attention_forward.1} parent=1 // pred_check_branch
      %792 = sbr.rel (0) target = $region25
    $region24: #{attention_forward.1} parent=1 // pred_region
      %793 = dma.done [#allocation3], 128
    $region25: #{attention_forward.1} parent=1 // pred_fallthru
      _
    %794 = vsyncpa [#allocation3], 1

</llo_original>
